<compile_context>
chip_gen: v5e
topology: v5e:2x2
jax: 0.10.0
libtpu: 0.0.40
codegen_flags: <defaults>
</compile_context>

<pallas_src>
import jax
import jax.numpy as jnp
from jax.experimental import pallas as pl
from jax.experimental.pallas import tpu as pltpu

LANE = 128  # TPU lane width


def _round_up(n, m):
    return ((n + m - 1) // m) * m


def _mlp_kernel(xT_ref, w1_ref, b1_ref, w2_ref, b2_ref, w3_ref, b3_ref, o_ref):
    # xT_ref: (D, TB) bf16   -- batch on the lane axis
    # w1_ref: (16, D) bf16   b1_ref: (16, 1) f32
    # w2_ref: (32, 16) bf16  b2_ref: (32, 1) f32
    # w3_ref: (32, 1) f32    b3_ref: (1,)   f32 in SMEM
    # o_ref : (1, TB) f32    -- lane-dense output slab
    xT = xT_ref[...]

    # Layer 1: (16, D) @ (D, TB) -> (16, TB); f32 accumulation on the MXU.
    h1 = jnp.dot(w1_ref[...], xT, preferred_element_type=jnp.float32)
    h1 = jnp.maximum(h1 + b1_ref[...], 0.0)      # bias + ReLU in f32 (VPU)
    h1 = h1.astype(jnp.bfloat16)                 # back to bf16 for the next MXU op

    # Layer 2: (32, 16) @ (16, TB) -> (32, TB)
    h2 = jnp.dot(w2_ref[...], h1, preferred_element_type=jnp.float32)
    h2 = jnp.maximum(h2 + b2_ref[...], 0.0)

    # Layer 3 (output width 1): VPU multiply + sublane reduction keeps the
    # epilogue off the MXU and yields a lane-dense (1, TB) result directly.
    out = jnp.sum(h2 * w3_ref[...], axis=0, keepdims=True) + b3_ref[0]
    o_ref[...] = out.astype(o_ref.dtype)


def nn_h_relu_forward(x, params, *, tile_b=512):
    """Forward pass of NN_h_RELU as one fused Pallas TPU kernel.

    x: (B, D) float32
    params: PyTorch-layout weights: w1 (16,D), b1 (16,), w2 (32,16), b2 (32,),
            w3 (1,32), b3 (1,)
    returns: (B, 1) float32
    """
    B, D = x.shape
    # Lane-dense batch tile: multiple of 128 (also multiple of 16 for bf16
    # packing); small enough to double-buffer comfortably within v7x's 64 MiB VMEM.
    TB = min(tile_b, _round_up(B, LANE))
    B_pad = _round_up(B, TB)
    num_tiles = B_pad // TB

    # Transposed, zero-padded, bf16 input: bf16 halves the dominant HBM traffic.
    xT = jnp.pad(x.T, ((0, 0), (0, B_pad - B))).astype(jnp.bfloat16)

    w1 = params["w1"].astype(jnp.bfloat16)                 # (16, D)
    w2 = params["w2"].astype(jnp.bfloat16)                 # (32, 16)
    b1 = params["b1"].reshape(16, 1).astype(jnp.float32)
    b2 = params["b2"].reshape(32, 1).astype(jnp.float32)
    w3 = params["w3"].reshape(32, 1).astype(jnp.float32)   # column for VPU epilogue
    b3 = params["b3"].reshape(1,).astype(jnp.float32)

    const = lambda shape: pl.BlockSpec(shape, lambda i: (0, 0))

    out = pl.pallas_call(
        _mlp_kernel,
        out_shape=jax.ShapeDtypeStruct((1, B_pad), jnp.float32),
        grid=(num_tiles,),
        in_specs=[
            pl.BlockSpec((D, TB), lambda i: (0, i)),   # x tile: pipelined over batch
            const((16, D)),                            # weights/biases: constant index
            const((16, 1)),                            # maps -> resident in VMEM,
            const((32, 16)),                           # DMA'd once
            const((32, 1)),
            const((32, 1)),
            pl.BlockSpec(memory_space=pltpu.MemorySpace.SMEM),  # scalar b3 in SMEM
        ],
        out_specs=pl.BlockSpec((1, TB), lambda i: (0, i)),      # lane-dense output
        compiler_params=pltpu.CompilerParams(
            dimension_semantics=("parallel",),          # megacore sharding on v7x
        ),
    )(xT, w1, b1, w2, b2, w3, b3)

    return out[0, :B].reshape(B, 1)


def init_params(key, dim_input):
    """PyTorch-Linear-style init U(-1/sqrt(fan_in), 1/sqrt(fan_in)), PyTorch layout."""
    ks = jax.random.split(key, 6)

    def lin(kw, kb, fan_in, fan_out):
        bound = 1.0 / float(fan_in) ** 0.5
        w = jax.random.uniform(kw, (fan_out, fan_in), jnp.float32, -bound, bound)
        b = jax.random.uniform(kb, (fan_out,), jnp.float32, -bound, bound)
        return w, b

    w1, b1 = lin(ks[0], ks[1], dim_input, 16)
    w2, b2 = lin(ks[2], ks[3], 16, 32)
    w3, b3 = lin(ks[4], ks[5], 32, 1)
    return {"w1": w1, "b1": b1, "w2": w2, "b2": b2, "w3": w3, "b3": b3}


def reference_forward_f32(x, p):
    """Pure-f32 reference with PyTorch Linear semantics (y = x @ W.T + b)."""
    h = jnp.maximum(x @ p["w1"].T + p["b1"], 0.0)
    h = jnp.maximum(h @ p["w2"].T + p["b2"], 0.0)
    return h @ p["w3"].T + p["b3"]


def reference_forward_matched(x, p):
    """Reference using the same bf16-input / f32-accumulation recipe as the kernel."""
    xb = x.astype(jnp.bfloat16)
    w1 = p["w1"].astype(jnp.bfloat16)
    w2 = p["w2"].astype(jnp.bfloat16)
    h = jnp.dot(xb, w1.T, preferred_element_type=jnp.float32) + p["b1"]
    h = jnp.maximum(h, 0.0).astype(jnp.bfloat16)
    h = jnp.dot(h, w2.T, preferred_element_type=jnp.float32) + p["b2"]
    h = jnp.maximum(h, 0.0)
    return h @ p["w3"].T + p["b3"]


if __name__ == "__main__":
    key = jax.random.PRNGKey(0)
    k_x, k_p = jax.random.split(key)

    batch, dim_input = 8, 32
    x = jax.random.normal(k_x, (batch, dim_input), dtype=jnp.float32)
    params = init_params(k_p, dim_input)

    out = nn_h_relu_forward(x, params)
    out = jax.block_until_ready(out)
    assert out.shape == (batch, 1)

    # Tight check against a precision-matched reference (bf16 inputs, f32 accum).
    ref_matched = reference_forward_matched(x, params)
    assert jnp.allclose(out, ref_matched, atol=1e-3, rtol=1e-3), (
        float(jnp.max(jnp.abs(out - ref_matched))))

    # Loose check against the pure-f32 PyTorch-semantics reference.
    ref_f32 = reference_forward_f32(x, params)
    assert jnp.allclose(out, ref_f32, atol=5e-2, rtol=5e-2), (
        float(jnp.max(jnp.abs(out - ref_f32))))

    print("KERNEL_OK")
</pallas_src>

<mosaic_0001>
module attributes {stable_mosaic.version = 11 : i64} {
  func.func @_mlp_kernel(%arg0: i32, %arg1: memref<32x128xbf16, #tpu.memory_space<vmem>>, %arg2: memref<16x32xbf16, #tpu.memory_space<vmem>>, %arg3: memref<16x1xf32, #tpu.memory_space<vmem>>, %arg4: memref<32x16xbf16, #tpu.memory_space<vmem>>, %arg5: memref<32x1xf32, #tpu.memory_space<vmem>>, %arg6: memref<32x1xf32, #tpu.memory_space<vmem>>, %arg7: memref<1xf32, #tpu.memory_space<smem>>, %arg8: memref<1x128xf32, #tpu.memory_space<vmem>>) attributes {dimension_semantics = [#tpu.dimension_semantics<parallel>], iteration_bounds = array<i64: 1>, scalar_prefetch = 0 : i64, scratch_operands = 0 : i64, tpu.core_type = #tpu.core_type<tc>, window_params = [{transform_indices = @transform_0, window_bounds = array<i64: 32, 128>}, {pipeline_mode = #tpu.pipeline_mode<synchronous>, transform_indices = @transform_1, window_bounds = array<i64: 16, 32>}, {pipeline_mode = #tpu.pipeline_mode<synchronous>, transform_indices = @transform_2, window_bounds = array<i64: 16, 1>}, {pipeline_mode = #tpu.pipeline_mode<synchronous>, transform_indices = @transform_3, window_bounds = array<i64: 32, 16>}, {pipeline_mode = #tpu.pipeline_mode<synchronous>, transform_indices = @transform_4, window_bounds = array<i64: 32, 1>}, {pipeline_mode = #tpu.pipeline_mode<synchronous>, transform_indices = @transform_5, window_bounds = array<i64: 32, 1>}, {transform_indices = @transform_6, window_bounds = array<i64: 1>}, {transform_indices = @transform_7, window_bounds = array<i64: 1, 128>}]} {
    %c0 = arith.constant 0 : index
    %c0_0 = arith.constant 0 : index
    %0 = vector.load %arg1[%c0, %c0_0] : memref<32x128xbf16, #tpu.memory_space<vmem>>, vector<32x128xbf16>
    %c0_1 = arith.constant 0 : index
    %c0_2 = arith.constant 0 : index
    %1 = vector.load %arg2[%c0_1, %c0_2] : memref<16x32xbf16, #tpu.memory_space<vmem>>, vector<16x32xbf16>
    %cst = arith.constant dense<0.000000e+00> : vector<16x128xf32>
    %2 = tpu.matmul %1, %0, %cst {dimension_numbers = #tpu.dot_dimension_numbers<[1], [0], [0], [1], [0, 0, 1, 1], [], []>} : vector<16x32xbf16>, vector<32x128xbf16>, vector<16x128xf32> -> vector<16x128xf32>
    %c0_3 = arith.constant 0 : index
    %c0_4 = arith.constant 0 : index
    %3 = vector.load %arg3[%c0_3, %c0_4] : memref<16x1xf32, #tpu.memory_space<vmem>>, vector<16x1xf32>
    %4 = vector.broadcast %3 : vector<16x1xf32> to vector<16x128xf32>
    %5 = arith.addf %2, %4 : vector<16x128xf32>
    %cst_5 = arith.constant 0.000000e+00 : f32
    %6 = vector.broadcast %cst_5 : f32 to vector<16x128xf32>
    %7 = arith.maximumf %5, %6 : vector<16x128xf32>
    %8 = arith.truncf %7 : vector<16x128xf32> to vector<16x128xbf16>
    %c0_6 = arith.constant 0 : index
    %c0_7 = arith.constant 0 : index
    %9 = vector.load %arg4[%c0_6, %c0_7] : memref<32x16xbf16, #tpu.memory_space<vmem>>, vector<32x16xbf16>
    %cst_8 = arith.constant dense<0.000000e+00> : vector<32x128xf32>
    %10 = tpu.matmul %9, %8, %cst_8 {dimension_numbers = #tpu.dot_dimension_numbers<[1], [0], [0], [1], [0, 0, 1, 1], [], []>} : vector<32x16xbf16>, vector<16x128xbf16>, vector<32x128xf32> -> vector<32x128xf32>
    %c0_9 = arith.constant 0 : index
    %c0_10 = arith.constant 0 : index
    %11 = vector.load %arg5[%c0_9, %c0_10] : memref<32x1xf32, #tpu.memory_space<vmem>>, vector<32x1xf32>
    %12 = vector.broadcast %11 : vector<32x1xf32> to vector<32x128xf32>
    %13 = arith.addf %10, %12 : vector<32x128xf32>
    %cst_11 = arith.constant 0.000000e+00 : f32
    %14 = vector.broadcast %cst_11 : f32 to vector<32x128xf32>
    %15 = arith.maximumf %13, %14 : vector<32x128xf32>
    %c0_12 = arith.constant 0 : index
    %c0_13 = arith.constant 0 : index
    %16 = vector.load %arg6[%c0_12, %c0_13] : memref<32x1xf32, #tpu.memory_space<vmem>>, vector<32x1xf32>
    %17 = vector.broadcast %16 : vector<32x1xf32> to vector<32x128xf32>
    %18 = arith.mulf %15, %17 : vector<32x128xf32>
    %cst_14 = arith.constant dense<0.000000e+00> : vector<128xf32>
    %19 = vector.multi_reduction <add>, %18, %cst_14 [0] : vector<32x128xf32> to vector<128xf32>
    %20 = vector.shape_cast %19 : vector<128xf32> to vector<1x128xf32>
    %c0_15 = arith.constant 0 : index
    %21 = memref.load %arg7[%c0_15] : memref<1xf32, #tpu.memory_space<smem>>
    %22 = vector.broadcast %21 : f32 to vector<1x128xf32>
    %23 = arith.addf %20, %22 : vector<1x128xf32>
    %c0_16 = arith.constant 0 : index
    %c0_17 = arith.constant 0 : index
    %24 = vector.load %arg8[%c0_16, %c0_17] : memref<1x128xf32, #tpu.memory_space<vmem>>, vector<1x128xf32>
    tpu.vector_store %arg8[%c0_16, %c0_17], %23 {strides = array<i32>} : memref<1x128xf32, #tpu.memory_space<vmem>>, vector<1x128xf32>,
    return
  }
  func.func @transform_0(%arg0: i32) -> (i32, i32) {
    %c0_i32 = arith.constant 0 : i32
    %c0_i32_0 = arith.constant 0 : i32
    return %c0_i32, %arg0 : i32, i32
  }
  func.func @transform_1(%arg0: i32) -> (i32, i32) {
    %c0_i32 = arith.constant 0 : i32
    %c0_i32_0 = arith.constant 0 : i32
    %c0_i32_1 = arith.constant 0 : i32
    return %c0_i32, %c0_i32_0 : i32, i32
  }
  func.func @transform_2(%arg0: i32) -> (i32, i32) {
    %c0_i32 = arith.constant 0 : i32
    %c0_i32_0 = arith.constant 0 : i32
    %c0_i32_1 = arith.constant 0 : i32
    return %c0_i32, %c0_i32_0 : i32, i32
  }
  func.func @transform_3(%arg0: i32) -> (i32, i32) {
    %c0_i32 = arith.constant 0 : i32
    %c0_i32_0 = arith.constant 0 : i32
    %c0_i32_1 = arith.constant 0 : i32
    return %c0_i32, %c0_i32_0 : i32, i32
  }
  func.func @transform_4(%arg0: i32) -> (i32, i32) {
    %c0_i32 = arith.constant 0 : i32
    %c0_i32_0 = arith.constant 0 : i32
    %c0_i32_1 = arith.constant 0 : i32
    return %c0_i32, %c0_i32_0 : i32, i32
  }
  func.func @transform_5(%arg0: i32) -> (i32, i32) {
    %c0_i32 = arith.constant 0 : i32
    %c0_i32_0 = arith.constant 0 : i32
    %c0_i32_1 = arith.constant 0 : i32
    return %c0_i32, %c0_i32_0 : i32, i32
  }
  func.func @transform_6(%arg0: i32) -> i32 {
    %c0_i32 = arith.constant 0 : i32
    %c0_i32_0 = arith.constant 0 : i32
    return %c0_i32 : i32
  }
  func.func @transform_7(%arg0: i32) -> (i32, i32) {
    %c0_i32 = arith.constant 0 : i32
    %c0_i32_0 = arith.constant 0 : i32
    return %c0_i32, %arg0 : i32, i32
  }
}

</mosaic_0001>

<llo_original>
// kernel: tpu_custom_call.1
$region0: #{tpu_custom_call.1}
  #allocation0 [shape = 'u32[]', space=smem, size = 0x4, offset = 0x4, fixed_abs, tag = 'smem constant byte address 0x4 - core index']
  #allocation1 [shape = 'u32[72,128]{1,0:T(1,128)}', space=vmem, size = 0x9000, scoped, tag = 'internal scratch']
  #allocation2 [shape = 'f32[1]{0:T(128)S(6)}', space=smem, size = 0x200, scoped, tag = 'scoped memory for tpu_custom_call.1']
  %s0 = inlined_call_operand.vmem [shape: bf16[32,128], index: 0, kind: input, shape index: {}]
  %s1 = inlined_call_operand.vmem [shape: bf16[16,32], index: 1, kind: input, shape index: {}]
  %s2 = inlined_call_operand.vmem [shape: f32[16,1], index: 2, kind: input, shape index: {}]
  %s3 = inlined_call_operand.vmem [shape: bf16[32,16], index: 3, kind: input, shape index: {}]
  %s4 = inlined_call_operand.vmem [shape: f32[32,1], index: 4, kind: input, shape index: {}]
  %s5 = inlined_call_operand.vmem [shape: f32[32,1], index: 5, kind: input, shape index: {}]
  %s6 = inlined_call_operand.<no memory space> [shape: f32[1], index: 6, kind: input, shape index: {}]
  %s7 = inlined_call_operand.hbm [shape: f32[1,128], index: 7, kind: output, shape index: {}]
  %s8 = sld [smem:[#allocation0]]
  $region38: #{tpu_custom_call.1} parent=0
    _
  %s10 = ssub.s32 1, %s8
  %s11 = scalar_select 0, %s10, %s8
  %12 = sst [smem:[#allocation2]] %s6
  $region1: #{tpu_custom_call.1} parent=0
    #allocation3 [shape = 'u8[512]{0}', space=vmem, size = 0x400, scoped, tag = 'output window, operand 0, single buffered']
    #allocation4 [shape = 's32[1]{0}', space=sflag, size = 0x4, scoped, tag = 'scoped memory for tpu_custom_call.1']
    %13 = vsyncpa [#allocation4], 0
    // Predicated region
    $region2: #{tpu_custom_call.1} parent=1 // pred_check
      _
    $region3: #{tpu_custom_call.1} parent=1 // pred_check_branch
      %15 = sbr.rel (0) target = $region5
    $region4: #{tpu_custom_call.1} parent=1 // pred_region
      _
    $region5: #{tpu_custom_call.1} parent=1 // pred_fallthru
      _
    // Predicated region
    $region6: #{tpu_custom_call.1} parent=1 // pred_check
      _
    $region7: #{tpu_custom_call.1} parent=1 // pred_check_branch
      %17 = sbr.rel (0) target = $region9
    $region8: #{tpu_custom_call.1} parent=1 // pred_region
      _
    $region9: #{tpu_custom_call.1} parent=1 // pred_fallthru
      _
    // Predicated region
    $region10: #{tpu_custom_call.1} parent=1 // pred_check
      _
    $region11: #{tpu_custom_call.1} parent=1 // pred_check_branch
      %19 = sbr.rel (0) target = $region13
    $region12: #{tpu_custom_call.1} parent=1 // pred_region
      _
    $region13: #{tpu_custom_call.1} parent=1 // pred_fallthru
      _
    // Predicated region
    $region14: #{tpu_custom_call.1} parent=1 // pred_check
      _
    $region15: #{tpu_custom_call.1} parent=1 // pred_check_branch
      %21 = sbr.rel (0) target = $region17
    $region16: #{tpu_custom_call.1} parent=1 // pred_region
      _
    $region17: #{tpu_custom_call.1} parent=1 // pred_fallthru
      _
    // Predicated region
    $region18: #{tpu_custom_call.1} parent=1 // pred_check
      _
    $region19: #{tpu_custom_call.1} parent=1 // pred_check_branch
      %23 = sbr.rel (0) target = $region21
    $region20: #{tpu_custom_call.1} parent=1 // pred_region
      _
    $region21: #{tpu_custom_call.1} parent=1 // pred_fallthru
      _
    // Predicated region
    $region22: #{tpu_custom_call.1} parent=1 // pred_check
      _
    $region23: #{tpu_custom_call.1} parent=1 // pred_check_branch
      %25 = sbr.rel (0) target = $region25
    $region24: #{tpu_custom_call.1} parent=1 // pred_region
      _
    $region25: #{tpu_custom_call.1} parent=1 // pred_fallthru
      _
    // Predicated region
    $region26: #{tpu_custom_call.1} parent=1 // pred_check
      _
    $region27: #{tpu_custom_call.1} parent=1 // pred_check_branch
      %27 = sbr.rel (0) target = $region29
    $region28: #{tpu_custom_call.1} parent=1 // pred_region
      _
    $region29: #{tpu_custom_call.1} parent=1 // pred_fallthru
      _
    %v29 = vld [vmem:[%s0] sm:$0xf]
    %v30 = vld [vmem:[%s0 + $0x4] sm:$0xf]
    %v31 = vld [vmem:[%s0 + $0x8] sm:$0xf]
    %v32 = vld [vmem:[%s0 + $0xc] sm:$0xf]
    %v33 = vld [vmem:[%s1] sm:$0xf]
    %v34 = vld [vmem:[%s1 + $0x4] sm:$0xf]
    %v35 = vld [vmem:[%s2] sm:$0xff]
    %v36 = vld [vmem:[%s2 + $0x8] sm:$0xff]
    %38 = vset.pattern.permute.xlu0 0
    %39 = vperm.xlu0 %38, %v35
    %v40 = vpop.permute.xlu0 %39
    %43 = vset.pattern.permute.xlu0 0
    %44 = vperm.xlu0 %43, %v36
    %v45 = vpop.permute.xlu0 %44
    %v49 = vunpack.c.l.b16 %v33
    %v50 = vunpack.c.l.b16 %v34
    %v51 = vpack.c.b16 %v50, %v49
    %v56 = vunpack.c.l.b16 %v29
    %v57 = vunpack.c.l.b16 %v30
    %v58 = vunpack.c.l.b16 %v31
    %v59 = vunpack.c.l.b16 %v32
    %v60 = vpack.c.b16 %v57, %v56
    %v61 = vpack.c.b16 %v59, %v58
    %vm64 = vcmask 261120
    %v66 = vsel %vm64, %v51, 0
    %68 = vmatpush.bf16.msra.mxu0 0
    %69 = vmatpush.bf16.msra.mxu0 0
    %70 = vmatpush.bf16.msra.mxu0 0
    %71 = vmatpush.bf16.msra.mxu0 0
    %72 = vmatpush.bf16.msra.mxu0 0
    %73 = vmatpush.bf16.msra.mxu0 0
    %74 = vmatpush.bf16.msra.mxu0 %v61
    %75 = vmatpush.bf16.msra.mxu0 %v60
    %76 = vmatmul.bf16.gmra.mxu0 %v66
    %v77 = vpop.f32.mrf.mxu0
    %v78 = vadd.f32 %v40, %v77
    %v79 = vpop.f32.mrf.mxu0
    %v80 = vadd.f32 %v45, %v79
    %81 = vdwg.mxu0
    %v82 = vmax.f32 %v78, 0.0
    %v83 = vmax.f32 %v80, 0.0
    %v84 = vpack.c.bf16 %v83, %v82
    %v85 = vld [vmem:[%s3] sm:$0xf]
    %v86 = vld [vmem:[%s3 + $0x4] sm:$0xf]
    %v87 = vld [vmem:[%s3 + $0x8] sm:$0xf]
    %v88 = vld [vmem:[%s3 + $0xc] sm:$0xf]
    %v89 = vld [vmem:[%s4] sm:$0xff]
    %v90 = vld [vmem:[%s4 + $0x8] sm:$0xff]
    %v91 = vld [vmem:[%s4 + $0x10] sm:$0xff]
    %v92 = vld [vmem:[%s4 + $0x18] sm:$0xff]
    %94 = vset.pattern.permute.xlu0 0
    %95 = vperm.xlu0 %94, %v89
    %v96 = vpop.permute.xlu0 %95
    %99 = vset.pattern.permute.xlu0 0
    %100 = vperm.xlu0 %99, %v90
    %v101 = vpop.permute.xlu0 %100
    %104 = vset.pattern.permute.xlu0 0
    %105 = vperm.xlu0 %104, %v91
    %v106 = vpop.permute.xlu0 %105
    %109 = vset.pattern.permute.xlu0 0
    %110 = vperm.xlu0 %109, %v92
    %v111 = vpop.permute.xlu0 %110
    %v117 = vunpack.c.l.b16 %v85
    %v118 = vunpack.c.l.b16 %v86
    %v119 = vunpack.c.l.b16 %v87
    %v120 = vunpack.c.l.b16 %v88
    %v121 = vpack.c.b16 %v118, %v117
    %v122 = vpack.c.b16 %v120, %v119
    %vm123 = vcmask 130048
    %v125 = vsel %vm123, %v121, 0
    %v128 = vsel %vm123, %v122, 0
    %130 = vmatpush.bf16.msra.mxu0 0
    %131 = vmatpush.bf16.msra.mxu0 0
    %132 = vmatpush.bf16.msra.mxu0 0
    %133 = vmatpush.bf16.msra.mxu0 0
    %134 = vmatpush.bf16.msra.mxu0 0
    %135 = vmatpush.bf16.msra.mxu0 0
    %136 = vmatpush.bf16.msra.mxu0 0
    %137 = vmatpush.bf16.msra.mxu0 %v84
    %138 = vmatmul.bf16.gmra.mxu0 %v125
    %v139 = vpop.f32.mrf.mxu0
    %v140 = vadd.f32 %v96, %v139
    %v141 = vpop.f32.mrf.mxu0
    %v142 = vadd.f32 %v101, %v141
    %143 = vmatmul.bf16.gmra.mxu0 %v128
    %v144 = vpop.f32.mrf.mxu0
    %v145 = vadd.f32 %v106, %v144
    %v146 = vpop.f32.mrf.mxu0
    %v147 = vadd.f32 %v111, %v146
    %148 = vdwg.mxu0
    %v149 = vmax.f32 %v140, 0.0
    %v150 = vmax.f32 %v142, 0.0
    %v151 = vmax.f32 %v145, 0.0
    %v152 = vmax.f32 %v147, 0.0
    %v153 = vld [vmem:[%s5] sm:$0xff]
    %v154 = vld [vmem:[%s5 + $0x8] sm:$0xff]
    %v155 = vld [vmem:[%s5 + $0x10] sm:$0xff]
    %v156 = vld [vmem:[%s5 + $0x18] sm:$0xff]
    %158 = vset.pattern.permute.xlu0 0
    %159 = vperm.xlu0 %158, %v153
    %v160 = vpop.permute.xlu0 %159
    %163 = vset.pattern.permute.xlu0 0
    %164 = vperm.xlu0 %163, %v154
    %v165 = vpop.permute.xlu0 %164
    %168 = vset.pattern.permute.xlu0 0
    %169 = vperm.xlu0 %168, %v155
    %v170 = vpop.permute.xlu0 %169
    %173 = vset.pattern.permute.xlu0 0
    %174 = vperm.xlu0 %173, %v156
    %v175 = vpop.permute.xlu0 %174
    %v177 = vmul.f32 %v149, %v160
    %v178 = vmul.f32 %v150, %v165
    %v179 = vmul.f32 %v151, %v170
    %v180 = vmul.f32 %v152, %v175
    %v181 = vadd.f32 %v177, %v178
    %v182 = vadd.f32 %v181, %v179
    %v183 = vadd.f32 %v182, %v180
    %v184 = vrot.slane %v183, 4
    %v185 = vadd.f32 %v183, %v184
    %v186 = vrot.slane %v185, 2
    %v187 = vadd.f32 %v185, %v186
    %v188 = vrot.slane %v187, 1
    %v189 = vadd.f32 %v187, %v188
    %s190 = sld [smem:[#allocation2]]
    %v191 = vstv %s190
    %v192 = vadd.f32 %v189, %v191
    %193 = vst [vmem:[#allocation3] sm:$0x1] %v192
    // Predicated region
    $region30: #{tpu_custom_call.1} parent=1 // pred_check
      _
    $region31: #{tpu_custom_call.1} parent=1 // pred_check_branch
      %195 = sbr.rel (0) target = $region33
    $region32: #{tpu_custom_call.1} parent=1 // pred_region
      %197 = vsyncadd [#allocation4], 0
      %s199 = sshll.u32 [#allocation3], 4
      %s200 = int_to_ptr.vmem [resolvable:$true] %s199
      %s201 = sshll.u32 %s7, 4
      %s202 = int_to_ptr.hbm [resolvable:$true] %s201
      %204 = dma.vmem_to_hbm [thread:$0]  %s200, 16, %s202, [#allocation4]
    $region33: #{tpu_custom_call.1} parent=1 // pred_fallthru
      _
    // Predicated region
    $region34: #{tpu_custom_call.1} parent=1 // pred_check
      _
    $region35: #{tpu_custom_call.1} parent=1 // pred_check_branch
      %206 = sbr.rel (0) target = $region37
    $region36: #{tpu_custom_call.1} parent=1 // pred_region
      %208 = dma.done [#allocation4], 16
    $region37: #{tpu_custom_call.1} parent=1 // pred_fallthru
      _
    %209 = vsyncpa [#allocation4], 1

</llo_original>
